<compile_context>
chip_gen: v7x
topology: tpu7x:2x2x1
jax: 0.10.0
libtpu: 0.0.40
codegen_flags: <defaults>
</compile_context>

<pallas_src>
import functools
import math

import jax
import jax.numpy as jnp
from jax.experimental import pallas as pl
from jax.experimental.pallas import tpu as pltpu


def build_pe(max_len: int, d_model: int) -> jnp.ndarray:
    """Deterministic positional-encoding table, shape (max_len, d_model)."""
    position = jnp.arange(max_len, dtype=jnp.float32)[:, None]          # (L, 1)
    div_term = jnp.exp(
        jnp.arange(0, d_model, 2, dtype=jnp.float32)
        * (-math.log(10000.0) / d_model)
    )                                                                   # (ceil(D/2),)
    angles = position * div_term                                        # (L, ceil(D/2))
    pe = jnp.zeros((max_len, d_model), dtype=jnp.float32)
    pe = pe.at[:, 0::2].set(jnp.sin(angles))
    pe = pe.at[:, 1::2].set(jnp.cos(angles)[:, : d_model // 2])         # odd-D safe
    return pe


def _pe_add_kernel(x_ref, pe_ref, o_ref, *, batch: int):
    # x_ref / o_ref: (TILE_S, B*D)    pe_ref: (TILE_S, D)
    pe = pe_ref[...]
    if batch > 1:
        # Replicate pe along the lane axis inside VMEM (cheap vreg copies; the
        # kernel is HBM-bound, so this keeps pe's HBM stream at S*D bytes).
        pe = jnp.tile(pe, (1, batch))
    o_ref[...] = (x_ref[...] + pe).astype(o_ref.dtype)


def _choose_tile_s(S: int, row_bytes: int, target_bytes: int = 2 << 20) -> int:
    """Rows per grid step: ~2 MiB of x per tile, multiple of 8 (sublane)."""
    rows = max(8, target_bytes // max(row_bytes, 1))
    rows = min(rows, S)
    if rows != S:
        rows = max(8, (rows // 8) * 8)
    return rows


def positional_encoding_forward(x: jnp.ndarray, pe: jnp.ndarray, *,
                                tile_s: int | None = None) -> jnp.ndarray:
    """x: (seq_len, batch, d_model); pe: (max_len, d_model). Returns x + pe[:S]."""
    S, B, D = x.shape
    max_len = pe.shape[0]
    assert pe.shape == (max_len, D) and max_len >= S

    x2d = x.reshape(S, B * D)                 # free reshape; lane-dense last dim
    itemsize = jnp.dtype(x.dtype).itemsize
    if tile_s is None:
        tile_s = _choose_tile_s(S, B * D * itemsize)
    tile_s = min(tile_s, S)

    # BlockSpec rule: second-to-last block dim must be a multiple of 8 or equal
    # the array's full extent.  x2d always satisfies this (tile_s is a multiple
    # of 8 unless tile_s == S).  pe's full extent is max_len, so for a ragged
    # tile_s (== S, S % 8 != 0) we pass a pre-sliced pe whose extent matches.
    pe_in = pe
    if tile_s % 8 != 0 and tile_s != max_len:
        pe_in = pe[:S]

    out2d = pl.pallas_call(
        functools.partial(_pe_add_kernel, batch=B),
        out_shape=jax.ShapeDtypeStruct((S, B * D), x.dtype),
        grid=(pl.cdiv(S, tile_s),),
        in_specs=[
            pl.BlockSpec((tile_s, B * D), lambda i: (i, 0)),
            pl.BlockSpec((tile_s, D), lambda i: (i, 0)),
        ],
        out_specs=pl.BlockSpec((tile_s, B * D), lambda i: (i, 0)),
        compiler_params=pltpu.CompilerParams(
            dimension_semantics=("parallel",),
            vmem_limit_bytes=32 * 1024 * 1024,
        ),
    )(x2d, pe_in)
    return out2d.reshape(S, B, D)


if __name__ == "__main__":
    # Small shapes consistent with the module: d_model=512, max_len=100.
    seq_len, batch, d_model, max_len = 16, 2, 512, 100

    key = jax.random.PRNGKey(0)
    x = jax.random.normal(key, (seq_len, batch, d_model), dtype=jnp.float32)
    pe = build_pe(max_len, d_model)

    # Pure-JAX reference for the module's forward.
    ref = x + pe[:seq_len][:, None, :]

    # Default (production-sized) tiling — single tile at this small demo shape.
    out = jax.block_until_ready(positional_encoding_forward(x, pe))
    assert out.shape == (seq_len, batch, d_model)
    assert jnp.allclose(out, ref, atol=1e-6, rtol=1e-6)

    # Forced-small tile to exercise the multi-step pipelined grid path.
    out_tiled = jax.block_until_ready(positional_encoding_forward(x, pe, tile_s=8))
    assert jnp.allclose(out_tiled, ref, atol=1e-6, rtol=1e-6)

    print("KERNEL_OK")
</pallas_src>

<mosaic_0001>
module attributes {stable_mosaic.version = 11 : i64} {
  func.func @_pe_add_kernel(%arg0: i32, %arg1: memref<16x1024xf32, #tpu.memory_space<vmem>>, %arg2: memref<16x512xf32, #tpu.memory_space<vmem>>, %arg3: memref<16x1024xf32, #tpu.memory_space<vmem>>) attributes {dimension_semantics = [#tpu.dimension_semantics<parallel>], iteration_bounds = array<i64: 1>, scalar_prefetch = 0 : i64, scratch_operands = 0 : i64, tpu.core_type = #tpu.core_type<tc>, window_params = [{transform_indices = @transform_0, window_bounds = array<i64: 16, 1024>}, {transform_indices = @transform_1, window_bounds = array<i64: 16, 512>}, {transform_indices = @transform_2, window_bounds = array<i64: 16, 1024>}]} {
    %c0 = arith.constant 0 : index
    %c0_0 = arith.constant 0 : index
    %0 = vector.load %arg2[%c0, %c0_0] : memref<16x512xf32, #tpu.memory_space<vmem>>, vector<16x512xf32>
    %1 = tpu.concatenate %0, %0 in 1 : vector<16x512xf32>, vector<16x512xf32> -> vector<16x1024xf32>
    %c0_1 = arith.constant 0 : index
    %c0_2 = arith.constant 0 : index
    %2 = vector.load %arg1[%c0_1, %c0_2] : memref<16x1024xf32, #tpu.memory_space<vmem>>, vector<16x1024xf32>
    %3 = arith.addf %2, %1 : vector<16x1024xf32>
    %c0_3 = arith.constant 0 : index
    %c0_4 = arith.constant 0 : index
    %4 = vector.load %arg3[%c0_3, %c0_4] : memref<16x1024xf32, #tpu.memory_space<vmem>>, vector<16x1024xf32>
    tpu.vector_store %arg3[%c0_3, %c0_4], %3 {strides = array<i32>} : memref<16x1024xf32, #tpu.memory_space<vmem>>, vector<16x1024xf32>,
    return
  }
  func.func @transform_0(%arg0: i32) -> (i32, i32) {
    %c0_i32 = arith.constant 0 : i32
    %c0_i32_0 = arith.constant 0 : i32
    return %arg0, %c0_i32 : i32, i32
  }
  func.func @transform_1(%arg0: i32) -> (i32, i32) {
    %c0_i32 = arith.constant 0 : i32
    %c0_i32_0 = arith.constant 0 : i32
    return %arg0, %c0_i32 : i32, i32
  }
  func.func @transform_2(%arg0: i32) -> (i32, i32) {
    %c0_i32 = arith.constant 0 : i32
    %c0_i32_0 = arith.constant 0 : i32
    return %arg0, %c0_i32 : i32, i32
  }
}

</mosaic_0001>

<llo_original>
// kernel: tpu_custom_call.1
$region0: #{tpu_custom_call.1}
  #allocation0 [shape = 'u32[]', space=smem, size = 0x4, offset = 0x4, fixed_abs, tag = 'smem constant byte address 0x4 - core index']
  #allocation1 [shape = 'u32[144,128]{1,0:T(1,128)}', space=vmem, size = 0x12000, scoped, tag = 'internal scratch']
  %s0 = inlined_call_operand.hbm [shape: f32[16,1024], index: 0, kind: input, shape index: {}]
  %s1 = inlined_call_operand.hbm [shape: f32[100,512], index: 1, kind: input, shape index: {}]
  %s2 = inlined_call_operand.hbm [shape: f32[16,1024], index: 2, kind: output, shape index: {}]
  %s3 = sld [smem:[#allocation0]]
  $region26: #{tpu_custom_call.1} parent=0
    _
  %s5 = ssub.s32 1, %s3
  %s6 = scalar_select 0, %s5, %s3
  $region1: #{tpu_custom_call.1} parent=0
    #allocation2 [shape = 'u8[65536]{0}', space=vmem, size = 0x10000, scoped, tag = 'input window, operand 0, single buffered']
    #allocation3 [shape = 's32[1]{0}', space=sflag, size = 0x4, scoped, tag = 'scoped memory for tpu_custom_call.1']
    #allocation4 [shape = 's32[1]{0}', space=sflag, size = 0x4, scoped, tag = 'scoped memory for tpu_custom_call.1']
    #allocation5 [shape = 'u8[32768]{0}', space=vmem, size = 0x8000, scoped, tag = 'input window, operand 1, single buffered']
    #allocation6 [shape = 's32[1]{0}', space=sflag, size = 0x4, scoped, tag = 'scoped memory for tpu_custom_call.1']
    #allocation7 [shape = 'u8[65536]{0}', space=vmem, size = 0x10000, scoped, tag = 'output window, operand 0, single buffered']
    %7 = vsyncpa [#allocation3], 0
    %8 = vsyncpa [#allocation6], 0
    %9 = vsyncpa [#allocation4], 0
    // Predicated region
    $region2: #{tpu_custom_call.1} parent=1 // pred_check
      _
    $region3: #{tpu_custom_call.1} parent=1 // pred_check_branch
      %11 = sbr.rel (0) target = $region5
    $region4: #{tpu_custom_call.1} parent=1 // pred_region
      %s13 = ssub.s32 2048, 2048
      %14 = vsyncadd [#allocation3], %s13
      %s15 = sshll.u32 [#allocation2], 4
      %s16 = int_to_ptr.vmem [resolvable:$true] %s15
      %21 = dma.hbm_to_vmem [thread:$0]  %s0, 2048, %s16, [#allocation3], 1024, 1024, 64
    $region5: #{tpu_custom_call.1} parent=1 // pred_fallthru
      _
    // Predicated region
    $region6: #{tpu_custom_call.1} parent=1 // pred_check
      _
    $region7: #{tpu_custom_call.1} parent=1 // pred_check_branch
      %23 = sbr.rel (0) target = $region9
    $region8: #{tpu_custom_call.1} parent=1 // pred_region
      %s25 = ssub.s32 1024, 1024
      %26 = vsyncadd [#allocation6], %s25
      %s27 = sshll.u32 [#allocation5], 4
      %s28 = int_to_ptr.vmem [resolvable:$true] %s27
      %33 = dma.hbm_to_vmem [thread:$0]  %s1, 1024, %s28, [#allocation6], 512, 512, 32
    $region9: #{tpu_custom_call.1} parent=1 // pred_fallthru
      _
    // Predicated region
    $region10: #{tpu_custom_call.1} parent=1 // pred_check
      _
    $region11: #{tpu_custom_call.1} parent=1 // pred_check_branch
      %35 = sbr.rel (0) target = $region13
    $region12: #{tpu_custom_call.1} parent=1 // pred_region
      %36 = dma.done [#allocation3], 2048
    $region13: #{tpu_custom_call.1} parent=1 // pred_fallthru
      _
    // Predicated region
    $region14: #{tpu_custom_call.1} parent=1 // pred_check
      _
    $region15: #{tpu_custom_call.1} parent=1 // pred_check_branch
      %38 = sbr.rel (0) target = $region17
    $region16: #{tpu_custom_call.1} parent=1 // pred_region
      %39 = dma.done [#allocation6], 1024
    $region17: #{tpu_custom_call.1} parent=1 // pred_fallthru
      _
    %v40 = vld [vmem:[#allocation5] sm:$0xff]
    %v41 = vld [vmem:[#allocation5 + $0x8] sm:$0xff]
    %v42 = vld [vmem:[#allocation5 + $0x10] sm:$0xff]
    %v43 = vld [vmem:[#allocation5 + $0x18] sm:$0xff]
    %v44 = vld [vmem:[#allocation5 + $0x20] sm:$0xff]
    %v45 = vld [vmem:[#allocation5 + $0x28] sm:$0xff]
    %v46 = vld [vmem:[#allocation5 + $0x30] sm:$0xff]
    %v47 = vld [vmem:[#allocation5 + $0x38] sm:$0xff]
    %v48 = vld [vmem:[#allocation2] sm:$0xff]
    %v49 = vld [vmem:[#allocation2 + $0x8] sm:$0xff]
    %v50 = vld [vmem:[#allocation2 + $0x10] sm:$0xff]
    %v51 = vld [vmem:[#allocation2 + $0x18] sm:$0xff]
    %v52 = vld [vmem:[#allocation2 + $0x20] sm:$0xff]
    %v53 = vld [vmem:[#allocation2 + $0x28] sm:$0xff]
    %v54 = vld [vmem:[#allocation2 + $0x30] sm:$0xff]
    %v55 = vld [vmem:[#allocation2 + $0x38] sm:$0xff]
    %v56 = vld [vmem:[#allocation2 + $0x40] sm:$0xff]
    %v57 = vld [vmem:[#allocation2 + $0x48] sm:$0xff]
    %v58 = vld [vmem:[#allocation2 + $0x50] sm:$0xff]
    %v59 = vld [vmem:[#allocation2 + $0x58] sm:$0xff]
    %v60 = vld [vmem:[#allocation2 + $0x60] sm:$0xff]
    %v61 = vld [vmem:[#allocation2 + $0x68] sm:$0xff]
    %v62 = vld [vmem:[#allocation2 + $0x70] sm:$0xff]
    %v63 = vld [vmem:[#allocation2 + $0x78] sm:$0xff]
    %v64 = vadd.f32 %v48, %v40
    %v65 = vadd.f32 %v49, %v41
    %v66 = vadd.f32 %v50, %v42
    %v67 = vadd.f32 %v51, %v43
    %v68 = vadd.f32 %v52, %v40
    %v69 = vadd.f32 %v53, %v41
    %v70 = vadd.f32 %v54, %v42
    %v71 = vadd.f32 %v55, %v43
    %v72 = vadd.f32 %v56, %v44
    %v73 = vadd.f32 %v57, %v45
    %v74 = vadd.f32 %v58, %v46
    %v75 = vadd.f32 %v59, %v47
    %v76 = vadd.f32 %v60, %v44
    %v77 = vadd.f32 %v61, %v45
    %v78 = vadd.f32 %v62, %v46
    %v79 = vadd.f32 %v63, %v47
    %80 = vst [vmem:[#allocation7] sm:$0xff] %v64
    %81 = vst [vmem:[#allocation7 + $0x8] sm:$0xff] %v65
    %82 = vst [vmem:[#allocation7 + $0x10] sm:$0xff] %v66
    %83 = vst [vmem:[#allocation7 + $0x18] sm:$0xff] %v67
    %84 = vst [vmem:[#allocation7 + $0x20] sm:$0xff] %v68
    %85 = vst [vmem:[#allocation7 + $0x28] sm:$0xff] %v69
    %86 = vst [vmem:[#allocation7 + $0x30] sm:$0xff] %v70
    %87 = vst [vmem:[#allocation7 + $0x38] sm:$0xff] %v71
    %88 = vst [vmem:[#allocation7 + $0x40] sm:$0xff] %v72
    %89 = vst [vmem:[#allocation7 + $0x48] sm:$0xff] %v73
    %90 = vst [vmem:[#allocation7 + $0x50] sm:$0xff] %v74
    %91 = vst [vmem:[#allocation7 + $0x58] sm:$0xff] %v75
    %92 = vst [vmem:[#allocation7 + $0x60] sm:$0xff] %v76
    %93 = vst [vmem:[#allocation7 + $0x68] sm:$0xff] %v77
    %94 = vst [vmem:[#allocation7 + $0x70] sm:$0xff] %v78
    %95 = vst [vmem:[#allocation7 + $0x78] sm:$0xff] %v79
    // Predicated region
    $region18: #{tpu_custom_call.1} parent=1 // pred_check
      _
    $region19: #{tpu_custom_call.1} parent=1 // pred_check_branch
      %97 = sbr.rel (0) target = $region21
    $region20: #{tpu_custom_call.1} parent=1 // pred_region
      %s99 = ssub.s32 2048, 2048
      %100 = vsyncadd [#allocation4], %s99
      %s101 = sshll.u32 [#allocation7], 4
      %s102 = int_to_ptr.vmem [resolvable:$true] %s101
      %107 = dma.vmem_to_hbm [thread:$0]  %s102, 2048, %s2, [#allocation4], 1024, 1024, 64
    $region21: #{tpu_custom_call.1} parent=1 // pred_fallthru
      _
    // Predicated region
    $region22: #{tpu_custom_call.1} parent=1 // pred_check
      _
    $region23: #{tpu_custom_call.1} parent=1 // pred_check_branch
      %109 = sbr.rel (0) target = $region25
    $region24: #{tpu_custom_call.1} parent=1 // pred_region
      %110 = dma.done [#allocation4], 2048
    $region25: #{tpu_custom_call.1} parent=1 // pred_fallthru
      _
    %111 = vsyncpa [#allocation3], 1
    %112 = vsyncpa [#allocation6], 1
    %113 = vsyncpa [#allocation4], 1

</llo_original>
